<compile_context>
chip_gen: v5e
topology: v5e:2x2
jax: 0.10.0
libtpu: 0.0.40
codegen_flags: <defaults>
</compile_context>

<pallas_src>
import numpy as np
import jax
import jax.numpy as jnp
from jax import lax
from jax.experimental import pallas as pl
from jax.experimental.pallas import tpu as pltpu


def _device_kind() -> str:
    try:
        dev = jax.devices()[0]
        if getattr(dev, "platform", "") != "tpu":
            return ""
        return str(getattr(dev, "device_kind", "")).lower().replace(" ", "")
    except Exception:
        return ""


def _num_tensorcores() -> int:
    """TensorCores per chip that one pallas_call can feed via a 'parallel' grid axis."""
    kind = _device_kind()
    if not kind:
        return 1
    try:  # prefer a real hardware field over name matching
        info = pltpu.get_tpu_info()
        for attr in ("tensorcore_count", "num_tensorcores", "num_cores",
                     "num_cores_per_chip", "cores_per_chip", "core_count"):
            n = getattr(info, attr, None)
            if isinstance(n, (int, np.integer)) and 1 <= int(n) <= 8:
                return int(n)
    except Exception:
        pass
    if any(tag in kind for tag in ("v5e", "v5lite", "v6e", "v6lite", "trillium")):
        return 1                       # single-TensorCore generations
    # v7x / v5p / v4 ... and unknown future parts: fail toward 2 so both cores get work.
    return 2


def _vmem_capacity_bytes() -> int:
    try:
        info = pltpu.get_tpu_info()
        for attr in ("vmem_capacity_bytes", "vmem_size_bytes", "vmem_bytes"):
            n = getattr(info, attr, None)
            if isinstance(n, (int, np.integer)) and int(n) >= (8 << 20):
                return int(n)
    except Exception:
        pass
    kind = _device_kind()
    return (64 << 20) if "v7" in kind else (128 << 20)   # v7x per-TC vs v5e/v6e


def cpg_forward(coarse_seg, ll_feature, hl_feature, params, *,
                act_dtype=jnp.bfloat16, out_dtype=jnp.float32, batch_block=None):
    """Fused CPGmodule forward (eval mode: BN uses running stats, Dropout2d = identity)."""
    B, N, H, W = coarse_seg.shape
    _, Cin, Hl, Wl = ll_feature.shape
    assert (Hl, Wl) == (H, W), "ll_feature spatial must match coarse_seg"
    _, C2, Hh, Wh = hl_feature.shape
    MID = params["w1"].shape[0]
    OUTC = params["w2"].shape[0]
    HW = H * W
    assert params["up_w"].shape[:2] == (C2, MID)
    assert params["up_w"].shape[-2:] == (3, 3), "GAP/upconv collapse assumes kernel_size=3"
    # TODO(synk): the collapse below also assumes ConvTranspose2d(stride=2, padding=1,
    # output_padding=1) — the CPGmodule defaults; assert/plumb them if made configurable.

    # ---------------- wrapper-side layout: batch folded into the lane dim ----------------
    coarse_nl = jnp.transpose(coarse_seg.reshape(B, N, HW), (1, 0, 2)) \
                   .reshape(N, B * HW).astype(act_dtype)
    ll_nl = jnp.transpose(ll_feature.reshape(B, Cin, HW), (1, 0, 2)) \
               .reshape(Cin, B * HW).astype(act_dtype)

    # ---------------- F_scf = GAP(ConvTranspose2d(hl)) fully precomputed -----------------
    # Only the kh=0 taps at ih=0 and kw=0 taps at iw=0 are cropped by the output window,
    # so GAP collapses (inclusion/exclusion) to four tiny dots — done here in XLA.
    inv_area = 1.0 / float((2 * Hh) * (2 * Wh))
    hl32 = hl_feature.astype(jnp.float32)
    sum_all = jnp.sum(hl32, axis=(2, 3))                   # (B, C2) all taps
    row0 = jnp.sum(hl32[:, :, 0, :], axis=2)               # (B, C2) ih = 0 row
    col0 = jnp.sum(hl32[:, :, :, 0], axis=2)               # (B, C2) iw = 0 col
    corner = hl32[:, :, 0, 0]                              # (B, C2)
    up_w = params["up_w"].astype(jnp.float32)              # (C2, MID, 3, 3)
    w_all = jnp.sum(up_w, axis=(2, 3))
    w_kh0 = jnp.sum(up_w[:, :, 0, :], axis=2)
    w_kw0 = jnp.sum(up_w[:, :, :, 0], axis=2)
    w_00 = up_w[:, :, 0, 0]
    fscf = (sum_all @ w_all - row0 @ w_kh0 - col0 @ w_kw0 + corner @ w_00) * inv_area
    fscf = (fscf + params["up_b"][None, :].astype(jnp.float32)).reshape(B, 1, MID)

    # ---------------- fold BatchNorm (eval) into conv1; MXU-native weight dtype ----------
    bn_scale = params["bn_scale"].astype(jnp.float32)
    w1f = (params["w1"].astype(jnp.float32) * bn_scale[:, None]).astype(act_dtype)
    bnb = params["bn_bias"].reshape(MID, 1).astype(jnp.float32)
    w2 = params["w2"].astype(jnp.float32)                  # conv2/context/guidance stay f32
    b2 = params["b2"].reshape(OUTC, 1).astype(jnp.float32)

    # ---------------- DMA-aware grid granularity + generation-aware VMEM budget ----------
    act_bytes = jnp.dtype(act_dtype).itemsize
    out_bytes = jnp.dtype(out_dtype).itemsize
    ncores = _num_tensorcores()
    usable_vmem = max(16 << 20, _vmem_capacity_bytes() - (8 << 20))   # leave headroom

    per_batch_bytes = HW * ((N + Cin) * act_bytes + OUTC * out_bytes)
    if batch_block is None:
        if B * per_batch_bytes <= (128 << 10):
            grid_target = ncores               # tiny problem: per-step overhead dominates
        else:
            by_bytes = (B * per_batch_bytes + (1 << 20) - 1) // (1 << 20)  # ~1 MiB / step
            grid_target = min(B, max(ncores, 3, int(by_bytes)))
        bb = max(1, min(B // max(1, grid_target), 8))      # cap static unroll depth
    else:
        bb = max(1, min(int(batch_block), B))
    while B % bb:
        bb -= 1

    def _step_bytes(bb_, dbuf_):
        blocks = bb_ * HW * ((N + Cin) * act_bytes + OUTC * out_bytes) + bb_ * MID * 4
        interm = bb_ * HW * (2 * MID + N) * 4              # mid + rf scratch + upcast temps
        consts = 4 * (MID * Cin + MID + OUTC * MID + OUTC)
        return dbuf_ * blocks + 2 * consts + interm

    while bb > 1 and _step_bytes(bb, 2) > usable_vmem // 2:
        bb = max(1, bb // 2)
        while B % bb:
            bb -= 1
    if (bb * HW) % 128 != 0:
        bb = B                                             # full-extent lane block fallback
    grid_b = B // bb
    vmem_limit = int(min(usable_vmem,
                         max(32 << 20, 2 * _step_bytes(bb, 2 if grid_b > 1 else 1))))
    # TODO(synk): for B == 1 on dual-TC chips, or HW*Cin too large for one block, add the
    # two-pass HW-tiled variant (accumulate `context` over HW tiles, then revisit tiles
    # for guidance/conv2) so both cores stay busy and VMEM stays bounded.

    def kernel(coarse_ref, ll_ref, fscf_ref, w1_ref, bnb_ref, w2_ref, b2_ref,
               out_ref, rf_ref):
        # conv1 (1x1, BN scale folded) over all bb images at once: one lane-dense
        # bf16 x bf16 -> f32 MXU matmul; bias + ReLU on the VPU (Dropout2d = id in eval).
        mid = jnp.dot(w1_ref[...], ll_ref[...], preferred_element_type=jnp.float32)
        mid = jnp.maximum(mid + bnb_ref[...], 0.0)                      # (MID, bb*HW) f32

        def softmax_lastdim(z):                                         # exact normalization
            e = jnp.exp(z - jnp.max(z, axis=-1, keepdims=True))
            return e / jnp.sum(e, axis=-1, keepdims=True)

        # Tiny per-image attention math on static, 128-aligned lane slices (HW % 128 == 0).
        for b in range(bb):
            lo = b * HW
            coarse_b = coarse_ref[:, lo:lo + HW].astype(jnp.float32)    # (N, HW)
            mid_b = mid[:, lo:lo + HW]                                  # (MID, HW)
            # context = coarse_b @ mid_b^T (contract HW); f32 keeps the softmax accurate.
            context = lax.dot_general(coarse_b, mid_b, (((1,), (1,)), ((), ())),
                                      preferred_element_type=jnp.float32)   # (N, MID)
            f_ctx = jnp.max(context, axis=-1, keepdims=True) - context
            attention = softmax_lastdim(fscf_ref[b] * f_ctx) + softmax_lastdim(f_ctx)
            # guidance = attention^T @ coarse_b (contract N; no explicit transpose).
            guidance = lax.dot_general(attention, coarse_b, (((0,), (0,)), ((), ())),
                                       preferred_element_type=jnp.float32)  # (MID, HW)
            rf_ref[:, lo:lo + HW] = guidance + mid_b

        # conv2 (1x1) over all bb images at once; bias add hoisted out of the loop.
        out = jnp.dot(w2_ref[...], rf_ref[...],
                      preferred_element_type=jnp.float32) + b2_ref[...]
        out_ref[...] = out.astype(out_ref.dtype)

    out_flat = pl.pallas_call(
        kernel,
        out_shape=jax.ShapeDtypeStruct((OUTC, B * HW), out_dtype),
        grid_spec=pltpu.PrefetchScalarGridSpec(
            num_scalar_prefetch=0,
            grid=(grid_b,),
            in_specs=[
                pl.BlockSpec((N, bb * HW), lambda i: (0, i)),       # coarse (act_dtype)
                pl.BlockSpec((Cin, bb * HW), lambda i: (0, i)),     # ll     (act_dtype)
                pl.BlockSpec((bb, 1, MID), lambda i: (i, 0, 0)),    # F_scf  (f32)
                # TODO(synk): single-buffer the constant operands below with
                # pipeline_mode=pl.Buffered(1) once pallas_call honors it on this jax.
                pl.BlockSpec((MID, Cin), lambda i: (0, 0)),         # conv1 weight (BN folded)
                pl.BlockSpec((MID, 1), lambda i: (0, 0)),           # BN bias
                pl.BlockSpec((OUTC, MID), lambda i: (0, 0)),        # conv2 weight (f32)
                pl.BlockSpec((OUTC, 1), lambda i: (0, 0)),          # conv2 bias
            ],
            out_specs=pl.BlockSpec((OUTC, bb * HW), lambda i: (0, i)),
            scratch_shapes=[pltpu.VMEM((MID, bb * HW), jnp.float32)],  # rf = guidance + mid
        ),
        compiler_params=pltpu.CompilerParams(
            dimension_semantics=("parallel",),
            vmem_limit_bytes=vmem_limit,
        ),
    )(coarse_nl, ll_nl, fscf, w1f, bnb, w2, b2)

    out = jnp.transpose(out_flat.reshape(OUTC, B, HW), (1, 0, 2))
    return out.reshape(B, OUTC, H, W)


def cpg_reference(coarse_seg, ll_feature, hl_feature, params):
    """Pure-JAX reference matching the PyTorch forward (eval mode)."""
    HIGH = lax.Precision.HIGHEST
    B, N, H, W = coarse_seg.shape
    MID = params["w1"].shape[0]
    x = jnp.einsum("mc,bchw->bmhw", params["w1"], ll_feature, precision=HIGH)
    x = x * params["bn_scale"][None, :, None, None] + params["bn_bias"][None, :, None, None]
    x = jnp.maximum(x, 0.0)                                   # ReLU; Dropout2d identity
    cs = coarse_seg.reshape(B, N, H * W)
    llr = jnp.transpose(x.reshape(B, MID, H * W), (0, 2, 1))
    context = jnp.einsum("bnk,bkm->bnm", cs, llr, precision=HIGH)
    f_ctx = jnp.max(context, axis=-1, keepdims=True) - context
    # ConvTranspose2d(k=3, s=2, p=1, op=1) via lhs-dilated conv with flipped kernel
    wt = params["up_w"]                                        # (C2, MID, 3, 3)
    wf = jnp.transpose(jnp.flip(wt, axis=(2, 3)), (1, 0, 2, 3))
    y = lax.conv_general_dilated(hl_feature, wf, window_strides=(1, 1),
                                 padding=((1, 2), (1, 2)), lhs_dilation=(2, 2),
                                 dimension_numbers=("NCHW", "OIHW", "NCHW"),
                                 precision=HIGH)
    y = y + params["up_b"][None, :, None, None]
    fscf = jnp.mean(y, axis=(2, 3))[:, None, :]                # (B, 1, MID)
    sm = lambda z: jax.nn.softmax(z, axis=-1)
    att = sm(fscf * f_ctx) + sm(f_ctx)
    guid = jnp.einsum("bnm,bnk->bmk", att, cs, precision=HIGH)
    rf = guid.reshape(B, MID, H, W) + x
    out = jnp.einsum("om,bmhw->bohw", params["w2"], rf, precision=HIGH)
    return out + params["b2"][None, :, None, None]


if __name__ == "__main__":
    B, IN_C, OUT_C = 2, 32, 8
    MID = IN_C // 4            # 8
    N_COA = 8                  # number of coarse-seg classes
    H = W = 16
    Hh = Wh = 8                # hl_feature spatial (upconv doubles it)
    C2 = 2 * IN_C              # upconv input channels

    key = jax.random.PRNGKey(0)
    ks = jax.random.split(key, 11)

    params = {
        "w1": jax.random.normal(ks[0], (MID, IN_C), jnp.float32) * (IN_C ** -0.5),
        "up_w": jax.random.normal(ks[5], (C2, MID, 3, 3), jnp.float32) * ((C2 * 9) ** -0.5),
        "up_b": 0.1 * jax.random.normal(ks[6], (MID,), jnp.float32),
        "w2": jax.random.normal(ks[7], (OUT_C, MID), jnp.float32) * (MID ** -0.5),  # kaiming(a=1)
        "b2": jnp.zeros((OUT_C,), jnp.float32),                                     # init: 0
    }
    # BatchNorm2d (eval mode) folded into a per-channel affine.
    gamma = 1.0 + 0.1 * jax.random.normal(ks[1], (MID,), jnp.float32)
    beta = 0.1 * jax.random.normal(ks[2], (MID,), jnp.float32)
    r_mean = 0.1 * jax.random.normal(ks[3], (MID,), jnp.float32)
    r_var = 1.0 + 0.1 * jax.random.uniform(ks[4], (MID,), jnp.float32)
    bn_scale = gamma / jnp.sqrt(r_var + 1e-5)
    params["bn_scale"] = bn_scale
    params["bn_bias"] = beta - r_mean * bn_scale

    coarse_seg = jax.random.normal(ks[8], (B, N_COA, H, W), jnp.float32)
    ll_feature = jax.random.normal(ks[9], (B, IN_C, H, W), jnp.float32)
    hl_feature = jax.random.normal(ks[10], (B, C2, Hh, Wh), jnp.float32)

    # 1) f32-activation path: exact eval-mode semantics of the PyTorch module.
    out_f32 = jax.block_until_ready(
        cpg_forward(coarse_seg, ll_feature, hl_feature, params, act_dtype=jnp.float32))
    ref_f32 = jax.block_until_ready(cpg_reference(coarse_seg, ll_feature, hl_feature, params))
    assert out_f32.shape == (B, OUT_C, H, W), out_f32.shape
    np.testing.assert_allclose(np.asarray(out_f32), np.asarray(ref_f32), rtol=3e-3, atol=3e-3)

    # 2) bf16-activation path (default; halves the dominant HBM->VMEM DMA traffic).
    #    The reference is evaluated on the SAME quantized operands the kernel uses
    #    (bf16-rounded coarse/ll and BN-folded conv1 weight), so the test checks the
    #    kernel arithmetic rather than the intentional quantization.
    out_bf16 = jax.block_until_ready(cpg_forward(coarse_seg, ll_feature, hl_feature, params))
    cs_q = coarse_seg.astype(jnp.bfloat16).astype(jnp.float32)
    ll_q = ll_feature.astype(jnp.bfloat16).astype(jnp.float32)
    w1f_q = (params["w1"] * params["bn_scale"][:, None]).astype(jnp.bfloat16).astype(jnp.float32)
    params_q = dict(params)
    params_q["w1"] = w1f_q
    params_q["bn_scale"] = jnp.ones_like(params["bn_scale"])
    ref_bf16 = jax.block_until_ready(cpg_reference(cs_q, ll_q, hl_feature, params_q))
    np.testing.assert_allclose(np.asarray(out_bf16), np.asarray(ref_bf16), rtol=3e-3, atol=3e-3)

    print("KERNEL_OK")
</pallas_src>

<mosaic_0001>
module attributes {stable_mosaic.version = 11 : i64} {
  func.func @kernel(%arg0: i32, %arg1: memref<8x512xf32, #tpu.memory_space<vmem>>, %arg2: memref<32x512xf32, #tpu.memory_space<vmem>>, %arg3: memref<2x1x8xf32, #tpu.memory_space<vmem>>, %arg4: memref<8x32xf32, #tpu.memory_space<vmem>>, %arg5: memref<8x1xf32, #tpu.memory_space<vmem>>, %arg6: memref<8x8xf32, #tpu.memory_space<vmem>>, %arg7: memref<8x1xf32, #tpu.memory_space<vmem>>, %arg8: memref<8x512xf32, #tpu.memory_space<vmem>>, %arg9: memref<8x512xf32, #tpu.memory_space<vmem>>) attributes {dimension_semantics = [#tpu.dimension_semantics<parallel>], iteration_bounds = array<i64: 1>, scalar_prefetch = 0 : i64, scratch_operands = 1 : i64, tpu.core_type = #tpu.core_type<tc>, window_params = [{transform_indices = @transform_0, window_bounds = array<i64: 8, 512>}, {transform_indices = @transform_1, window_bounds = array<i64: 32, 512>}, {transform_indices = @transform_2, window_bounds = array<i64: 2, 1, 8>}, {pipeline_mode = #tpu.pipeline_mode<synchronous>, transform_indices = @transform_3, window_bounds = array<i64: 8, 32>}, {pipeline_mode = #tpu.pipeline_mode<synchronous>, transform_indices = @transform_4, window_bounds = array<i64: 8, 1>}, {pipeline_mode = #tpu.pipeline_mode<synchronous>, transform_indices = @transform_5, window_bounds = array<i64: 8, 8>}, {pipeline_mode = #tpu.pipeline_mode<synchronous>, transform_indices = @transform_6, window_bounds = array<i64: 8, 1>}, {transform_indices = @transform_7, window_bounds = array<i64: 8, 512>}]} {
    %c0 = arith.constant 0 : index
    %c0_0 = arith.constant 0 : index
    %0 = vector.load %arg4[%c0, %c0_0] : memref<8x32xf32, #tpu.memory_space<vmem>>, vector<8x32xf32>
    %c0_1 = arith.constant 0 : index
    %c0_2 = arith.constant 0 : index
    %1 = vector.load %arg2[%c0_1, %c0_2] : memref<32x512xf32, #tpu.memory_space<vmem>>, vector<32x512xf32>
    %cst = arith.constant dense<0.000000e+00> : vector<8x512xf32>
    %2 = tpu.matmul %0, %1, %cst {dimension_numbers = #tpu.dot_dimension_numbers<[1], [0], [0], [1], [0, 0, 1, 1], [], []>} : vector<8x32xf32>, vector<32x512xf32>, vector<8x512xf32> -> vector<8x512xf32>
    %c0_3 = arith.constant 0 : index
    %c0_4 = arith.constant 0 : index
    %3 = vector.load %arg5[%c0_3, %c0_4] : memref<8x1xf32, #tpu.memory_space<vmem>>, vector<8x1xf32>
    %4 = vector.broadcast %3 : vector<8x1xf32> to vector<8x512xf32>
    %5 = arith.addf %2, %4 : vector<8x512xf32>
    %cst_5 = arith.constant 0.000000e+00 : f32
    %6 = vector.broadcast %cst_5 : f32 to vector<8x512xf32>
    %7 = arith.maximumf %5, %6 : vector<8x512xf32>
    %c0_6 = arith.constant 0 : index
    %c0_7 = arith.constant 0 : index
    %8 = vector.load %arg1[%c0_6, %c0_7] : memref<8x512xf32, #tpu.memory_space<vmem>>, vector<8x256xf32>
    %9 = vector.extract_strided_slice %7 {offsets = [0, 0], sizes = [8, 256], strides = [1, 1]} : vector<8x512xf32> to vector<8x256xf32>
    %cst_8 = arith.constant dense<0.000000e+00> : vector<8x8xf32>
    %10 = tpu.matmul %8, %9, %cst_8 {dimension_numbers = #tpu.dot_dimension_numbers<[1], [1], [0], [0], [0, 0, 1, 0], [], []>} : vector<8x256xf32>, vector<8x256xf32>, vector<8x8xf32> -> vector<8x8xf32>
    %cst_9 = arith.constant dense<0xFF800000> : vector<8xf32>
    %11 = vector.multi_reduction <maximumf>, %10, %cst_9 [1] : vector<8x8xf32> to vector<8xf32>
    %12 = vector.shape_cast %11 : vector<8xf32> to vector<8x1xf32>
    %13 = vector.broadcast %12 : vector<8x1xf32> to vector<8x8xf32>
    %14 = arith.subf %13, %10 : vector<8x8xf32>
    %c0_10 = arith.constant 0 : index
    %c0_11 = arith.constant 0 : index
    %c0_12 = arith.constant 0 : index
    %15 = vector.load %arg3[%c0_10, %c0_11, %c0_12] : memref<2x1x8xf32, #tpu.memory_space<vmem>>, vector<1x1x8xf32>
    %16 = vector.shape_cast %15 : vector<1x1x8xf32> to vector<1x8xf32>
    %17 = vector.broadcast %16 : vector<1x8xf32> to vector<8x8xf32>
    %18 = arith.mulf %17, %14 : vector<8x8xf32>
    %cst_13 = arith.constant dense<0xFF800000> : vector<8xf32>
    %19 = vector.multi_reduction <maximumf>, %18, %cst_13 [1] : vector<8x8xf32> to vector<8xf32>
    %20 = vector.shape_cast %19 : vector<8xf32> to vector<8x1xf32>
    %21 = vector.broadcast %20 : vector<8x1xf32> to vector<8x8xf32>
    %22 = arith.subf %18, %21 : vector<8x8xf32>
    %23 = math.exp %22 : vector<8x8xf32>
    %cst_14 = arith.constant dense<0.000000e+00> : vector<8xf32>
    %24 = vector.multi_reduction <add>, %23, %cst_14 [1] : vector<8x8xf32> to vector<8xf32>
    %25 = vector.shape_cast %24 : vector<8xf32> to vector<8x1xf32>
    %26 = vector.broadcast %25 : vector<8x1xf32> to vector<8x8xf32>
    %27 = arith.divf %23, %26 : vector<8x8xf32>
    %cst_15 = arith.constant dense<0xFF800000> : vector<8xf32>
    %28 = vector.multi_reduction <maximumf>, %14, %cst_15 [1] : vector<8x8xf32> to vector<8xf32>
    %29 = vector.shape_cast %28 : vector<8xf32> to vector<8x1xf32>
    %30 = vector.broadcast %29 : vector<8x1xf32> to vector<8x8xf32>
    %31 = arith.subf %14, %30 : vector<8x8xf32>
    %32 = math.exp %31 : vector<8x8xf32>
    %cst_16 = arith.constant dense<0.000000e+00> : vector<8xf32>
    %33 = vector.multi_reduction <add>, %32, %cst_16 [1] : vector<8x8xf32> to vector<8xf32>
    %34 = vector.shape_cast %33 : vector<8xf32> to vector<8x1xf32>
    %35 = vector.broadcast %34 : vector<8x1xf32> to vector<8x8xf32>
    %36 = arith.divf %32, %35 : vector<8x8xf32>
    %37 = arith.addf %27, %36 : vector<8x8xf32>
    %cst_17 = arith.constant dense<0.000000e+00> : vector<8x256xf32>
    %38 = tpu.matmul %37, %8, %cst_17 {dimension_numbers = #tpu.dot_dimension_numbers<[0], [0], [1], [1], [0, 1, 1, 1], [], []>} : vector<8x8xf32>, vector<8x256xf32>, vector<8x256xf32> -> vector<8x256xf32>
    %39 = arith.addf %38, %9 : vector<8x256xf32>
    %c0_18 = arith.constant 0 : index
    %c0_19 = arith.constant 0 : index
    %40 = vector.load %arg9[%c0_18, %c0_19] : memref<8x512xf32, #tpu.memory_space<vmem>>, vector<8x256xf32>
    tpu.vector_store %arg9[%c0_18, %c0_19], %39 {strides = array<i32>} : memref<8x512xf32, #tpu.memory_space<vmem>>, vector<8x256xf32>,
    %c0_20 = arith.constant 0 : index
    %c256 = arith.constant 256 : index
    %41 = vector.load %arg1[%c0_20, %c256] : memref<8x512xf32, #tpu.memory_space<vmem>>, vector<8x256xf32>
    %42 = vector.extract_strided_slice %7 {offsets = [0, 256], sizes = [8, 256], strides = [1, 1]} : vector<8x512xf32> to vector<8x256xf32>
    %cst_21 = arith.constant dense<0.000000e+00> : vector<8x8xf32>
    %43 = tpu.matmul %41, %42, %cst_21 {dimension_numbers = #tpu.dot_dimension_numbers<[1], [1], [0], [0], [0, 0, 1, 0], [], []>} : vector<8x256xf32>, vector<8x256xf32>, vector<8x8xf32> -> vector<8x8xf32>
    %cst_22 = arith.constant dense<0xFF800000> : vector<8xf32>
    %44 = vector.multi_reduction <maximumf>, %43, %cst_22 [1] : vector<8x8xf32> to vector<8xf32>
    %45 = vector.shape_cast %44 : vector<8xf32> to vector<8x1xf32>
    %46 = vector.broadcast %45 : vector<8x1xf32> to vector<8x8xf32>
    %47 = arith.subf %46, %43 : vector<8x8xf32>
    %c1 = arith.constant 1 : index
    %c0_23 = arith.constant 0 : index
    %c0_24 = arith.constant 0 : index
    %48 = vector.load %arg3[%c1, %c0_23, %c0_24] : memref<2x1x8xf32, #tpu.memory_space<vmem>>, vector<1x1x8xf32>
    %49 = vector.shape_cast %48 : vector<1x1x8xf32> to vector<1x8xf32>
    %50 = vector.broadcast %49 : vector<1x8xf32> to vector<8x8xf32>
    %51 = arith.mulf %50, %47 : vector<8x8xf32>
    %cst_25 = arith.constant dense<0xFF800000> : vector<8xf32>
    %52 = vector.multi_reduction <maximumf>, %51, %cst_25 [1] : vector<8x8xf32> to vector<8xf32>
    %53 = vector.shape_cast %52 : vector<8xf32> to vector<8x1xf32>
    %54 = vector.broadcast %53 : vector<8x1xf32> to vector<8x8xf32>
    %55 = arith.subf %51, %54 : vector<8x8xf32>
    %56 = math.exp %55 : vector<8x8xf32>
    %cst_26 = arith.constant dense<0.000000e+00> : vector<8xf32>
    %57 = vector.multi_reduction <add>, %56, %cst_26 [1] : vector<8x8xf32> to vector<8xf32>
    %58 = vector.shape_cast %57 : vector<8xf32> to vector<8x1xf32>
    %59 = vector.broadcast %58 : vector<8x1xf32> to vector<8x8xf32>
    %60 = arith.divf %56, %59 : vector<8x8xf32>
    %cst_27 = arith.constant dense<0xFF800000> : vector<8xf32>
    %61 = vector.multi_reduction <maximumf>, %47, %cst_27 [1] : vector<8x8xf32> to vector<8xf32>
    %62 = vector.shape_cast %61 : vector<8xf32> to vector<8x1xf32>
    %63 = vector.broadcast %62 : vector<8x1xf32> to vector<8x8xf32>
    %64 = arith.subf %47, %63 : vector<8x8xf32>
    %65 = math.exp %64 : vector<8x8xf32>
    %cst_28 = arith.constant dense<0.000000e+00> : vector<8xf32>
    %66 = vector.multi_reduction <add>, %65, %cst_28 [1] : vector<8x8xf32> to vector<8xf32>
    %67 = vector.shape_cast %66 : vector<8xf32> to vector<8x1xf32>
    %68 = vector.broadcast %67 : vector<8x1xf32> to vector<8x8xf32>
    %69 = arith.divf %65, %68 : vector<8x8xf32>
    %70 = arith.addf %60, %69 : vector<8x8xf32>
    %cst_29 = arith.constant dense<0.000000e+00> : vector<8x256xf32>
    %71 = tpu.matmul %70, %41, %cst_29 {dimension_numbers = #tpu.dot_dimension_numbers<[0], [0], [1], [1], [0, 1, 1, 1], [], []>} : vector<8x8xf32>, vector<8x256xf32>, vector<8x256xf32> -> vector<8x256xf32>
    %72 = arith.addf %71, %42 : vector<8x256xf32>
    %c0_30 = arith.constant 0 : index
    %c256_31 = arith.constant 256 : index
    %73 = vector.load %arg9[%c0_30, %c256_31] : memref<8x512xf32, #tpu.memory_space<vmem>>, vector<8x256xf32>
    tpu.vector_store %arg9[%c0_30, %c256_31], %72 {strides = array<i32>} : memref<8x512xf32, #tpu.memory_space<vmem>>, vector<8x256xf32>,
    %c0_32 = arith.constant 0 : index
    %c0_33 = arith.constant 0 : index
    %74 = vector.load %arg6[%c0_32, %c0_33] : memref<8x8xf32, #tpu.memory_space<vmem>>, vector<8x8xf32>
    %c0_34 = arith.constant 0 : index
    %c0_35 = arith.constant 0 : index
    %75 = vector.load %arg9[%c0_34, %c0_35] : memref<8x512xf32, #tpu.memory_space<vmem>>, vector<8x512xf32>
    %cst_36 = arith.constant dense<0.000000e+00> : vector<8x512xf32>
    %76 = tpu.matmul %74, %75, %cst_36 {dimension_numbers = #tpu.dot_dimension_numbers<[1], [0], [0], [1], [0, 0, 1, 1], [], []>} : vector<8x8xf32>, vector<8x512xf32>, vector<8x512xf32> -> vector<8x512xf32>
    %c0_37 = arith.constant 0 : index
    %c0_38 = arith.constant 0 : index
    %77 = vector.load %arg7[%c0_37, %c0_38] : memref<8x1xf32, #tpu.memory_space<vmem>>, vector<8x1xf32>
    %78 = vector.broadcast %77 : vector<8x1xf32> to vector<8x512xf32>
    %79 = arith.addf %76, %78 : vector<8x512xf32>
    %c0_39 = arith.constant 0 : index
    %c0_40 = arith.constant 0 : index
    %80 = vector.load %arg8[%c0_39, %c0_40] : memref<8x512xf32, #tpu.memory_space<vmem>>, vector<8x512xf32>
    tpu.vector_store %arg8[%c0_39, %c0_40], %79 {strides = array<i32>} : memref<8x512xf32, #tpu.memory_space<vmem>>, vector<8x512xf32>,
    return
  }
  func.func @transform_0(%arg0: i32) -> (i32, i32) {
    %c0_i32 = arith.constant 0 : i32
    %c0_i32_0 = arith.constant 0 : i32
    return %c0_i32, %arg0 : i32, i32
  }
  func.func @transform_1(%arg0: i32) -> (i32, i32) {
    %c0_i32 = arith.constant 0 : i32
    %c0_i32_0 = arith.constant 0 : i32
    return %c0_i32, %arg0 : i32, i32
  }
  func.func @transform_2(%arg0: i32) -> (i32, i32, i32) {
    %c0_i32 = arith.constant 0 : i32
    %c0_i32_0 = arith.constant 0 : i32
    %c0_i32_1 = arith.constant 0 : i32
    return %arg0, %c0_i32, %c0_i32_0 : i32, i32, i32
  }
  func.func @transform_3(%arg0: i32) -> (i32, i32) {
    %c0_i32 = arith.constant 0 : i32
    %c0_i32_0 = arith.constant 0 : i32
    %c0_i32_1 = arith.constant 0 : i32
    return %c0_i32, %c0_i32_0 : i32, i32
  }
  func.func @transform_4(%arg0: i32) -> (i32, i32) {
    %c0_i32 = arith.constant 0 : i32
    %c0_i32_0 = arith.constant 0 : i32
    %c0_i32_1 = arith.constant 0 : i32
    return %c0_i32, %c0_i32_0 : i32, i32
  }
  func.func @transform_5(%arg0: i32) -> (i32, i32) {
    %c0_i32 = arith.constant 0 : i32
    %c0_i32_0 = arith.constant 0 : i32
    %c0_i32_1 = arith.constant 0 : i32
    return %c0_i32, %c0_i32_0 : i32, i32
  }
  func.func @transform_6(%arg0: i32) -> (i32, i32) {
    %c0_i32 = arith.constant 0 : i32
    %c0_i32_0 = arith.constant 0 : i32
    %c0_i32_1 = arith.constant 0 : i32
    return %c0_i32, %c0_i32_0 : i32, i32
  }
  func.func @transform_7(%arg0: i32) -> (i32, i32) {
    %c0_i32 = arith.constant 0 : i32
    %c0_i32_0 = arith.constant 0 : i32
    return %c0_i32, %arg0 : i32, i32
  }
}

</mosaic_0001>

<llo_original>
// kernel: tpu_custom_call.1
$region0: #{tpu_custom_call.1}
  #allocation0 [shape = 'u32[]', space=smem, size = 0x4, offset = 0x4, fixed_abs, tag = 'smem constant byte address 0x4 - core index']
  #allocation1 [shape = 'u32[72,128]{1,0:T(1,128)}', space=vmem, size = 0x9000, scoped, tag = 'internal scratch']
  #allocation2 [shape = 'f32[8,512]{1,0:T(8,128)}', space=vmem, size = 0x4000, scoped, tag = 'scratch operand']
  %s0 = inlined_call_operand.hbm [shape: f32[8,512], index: 0, kind: input, shape index: {}]
  %s1 = inlined_call_operand.hbm [shape: f32[32,512], index: 1, kind: input, shape index: {}]
  %s2 = inlined_call_operand.hbm [shape: f32[2,1,8], index: 2, kind: input, shape index: {}]
  %s3 = inlined_call_operand.vmem [shape: f32[8,32], index: 3, kind: input, shape index: {}]
  %s4 = inlined_call_operand.vmem [shape: f32[8,1], index: 4, kind: input, shape index: {}]
  %s5 = inlined_call_operand.vmem [shape: f32[8,8], index: 5, kind: input, shape index: {}]
  %s6 = inlined_call_operand.vmem [shape: f32[8,1], index: 6, kind: input, shape index: {}]
  %s7 = inlined_call_operand.hbm [shape: f32[8,512], index: 7, kind: output, shape index: {}]
  %s8 = sld [smem:[#allocation0]]
  $region50: #{tpu_custom_call.1} parent=0
    _
  %s10 = ssub.s32 1, %s8
  %s11 = scalar_select 0, %s10, %s8
  $region1: #{tpu_custom_call.1} parent=0
    #allocation3 [shape = 'u8[16384]{0}', space=vmem, size = 0x4000, scoped, tag = 'input window, operand 0, single buffered']
    #allocation4 [shape = 's32[1]{0}', space=sflag, size = 0x4, scoped, tag = 'scoped memory for tpu_custom_call.1']
    #allocation5 [shape = 's32[1]{0}', space=sflag, size = 0x4, scoped, tag = 'scoped memory for tpu_custom_call.1']
    #allocation6 [shape = 'u8[65536]{0}', space=vmem, size = 0x10000, scoped, tag = 'input window, operand 1, single buffered']
    #allocation7 [shape = 's32[1]{0}', space=sflag, size = 0x4, scoped, tag = 'scoped memory for tpu_custom_call.1']
    #allocation8 [shape = 'u8[1024]{0}', space=vmem, size = 0x400, scoped, tag = 'input window, operand 2, single buffered']
    #allocation9 [shape = 'u8[16384]{0}', space=vmem, size = 0x4000, scoped, tag = 'output window, operand 0, single buffered']
    %12 = vsyncpa [#allocation4], 0
    %13 = vsyncpa [#allocation7], 0
    %14 = vsyncpa [#allocation5], 0
    // Predicated region
    $region2: #{tpu_custom_call.1} parent=1 // pred_check
      _
    $region3: #{tpu_custom_call.1} parent=1 // pred_check_branch
      %16 = sbr.rel (0) target = $region5
    $region4: #{tpu_custom_call.1} parent=1 // pred_region
      %18 = vsyncadd [#allocation4], 0
      %s20 = sshll.u32 %s0, 4
      %s21 = int_to_ptr.hbm [resolvable:$true] %s20
      %s22 = sshll.u32 [#allocation3], 4
      %s23 = int_to_ptr.vmem [resolvable:$true] %s22
      %25 = dma.hbm_to_vmem [thread:$0]  %s21, 512, %s23, [#allocation4]
    $region5: #{tpu_custom_call.1} parent=1 // pred_fallthru
      _
    // Predicated region
    $region6: #{tpu_custom_call.1} parent=1 // pred_check
      _
    $region7: #{tpu_custom_call.1} parent=1 // pred_check_branch
      %27 = sbr.rel (0) target = $region9
    $region8: #{tpu_custom_call.1} parent=1 // pred_region
      %29 = vsyncadd [#allocation7], 0
      %s30 = sshll.u32 %s1, 4
      %s31 = int_to_ptr.hbm [resolvable:$true] %s30
      %s32 = sshll.u32 [#allocation6], 4
      %s33 = int_to_ptr.vmem [resolvable:$true] %s32
      %38 = dma.hbm_to_vmem [thread:$0]  %s31, 2048, %s33, [#allocation7], 512, 512, 32
    $region9: #{tpu_custom_call.1} parent=1 // pred_fallthru
      _
    // Predicated region
    $region10: #{tpu_custom_call.1} parent=1 // pred_check
      _
    $region11: #{tpu_custom_call.1} parent=1 // pred_check_branch
      %40 = sbr.rel (0) target = $region13
    $region12: #{tpu_custom_call.1} parent=1 // pred_region
      %42 = vsyncadd [#allocation7], 0
      %s43 = sshll.u32 %s2, 4
      %s44 = int_to_ptr.hbm [resolvable:$true] %s43
      %s45 = sshll.u32 [#allocation8], 4
      %s46 = int_to_ptr.vmem [resolvable:$true] %s45
      %51 = dma.hbm_to_vmem [thread:$0]  %s44, 32, %s46, [#allocation7], 16, 16, 1
    $region13: #{tpu_custom_call.1} parent=1 // pred_fallthru
      _
    // Predicated region
    $region14: #{tpu_custom_call.1} parent=1 // pred_check
      _
    $region15: #{tpu_custom_call.1} parent=1 // pred_check_branch
      %53 = sbr.rel (0) target = $region17
    $region16: #{tpu_custom_call.1} parent=1 // pred_region
      _
    $region17: #{tpu_custom_call.1} parent=1 // pred_fallthru
      _
    // Predicated region
    $region18: #{tpu_custom_call.1} parent=1 // pred_check
      _
    $region19: #{tpu_custom_call.1} parent=1 // pred_check_branch
      %55 = sbr.rel (0) target = $region21
    $region20: #{tpu_custom_call.1} parent=1 // pred_region
      _
    $region21: #{tpu_custom_call.1} parent=1 // pred_fallthru
      _
    // Predicated region
    $region22: #{tpu_custom_call.1} parent=1 // pred_check
      _
    $region23: #{tpu_custom_call.1} parent=1 // pred_check_branch
      %57 = sbr.rel (0) target = $region25
    $region24: #{tpu_custom_call.1} parent=1 // pred_region
      _
    $region25: #{tpu_custom_call.1} parent=1 // pred_fallthru
      _
    // Predicated region
    $region26: #{tpu_custom_call.1} parent=1 // pred_check
      _
    $region27: #{tpu_custom_call.1} parent=1 // pred_check_branch
      %59 = sbr.rel (0) target = $region29
    $region28: #{tpu_custom_call.1} parent=1 // pred_region
      _
    $region29: #{tpu_custom_call.1} parent=1 // pred_fallthru
      _
    // Predicated region
    $region30: #{tpu_custom_call.1} parent=1 // pred_check
      _
    $region31: #{tpu_custom_call.1} parent=1 // pred_check_branch
      %61 = sbr.rel (0) target = $region33
    $region32: #{tpu_custom_call.1} parent=1 // pred_region
      %63 = dma.done [#allocation4], 512
    $region33: #{tpu_custom_call.1} parent=1 // pred_fallthru
      _
    // Predicated region
    $region34: #{tpu_custom_call.1} parent=1 // pred_check
      _
    $region35: #{tpu_custom_call.1} parent=1 // pred_check_branch
      %65 = sbr.rel (0) target = $region37
    $region36: #{tpu_custom_call.1} parent=1 // pred_region
      %67 = dma.done [#allocation7], 2048
    $region37: #{tpu_custom_call.1} parent=1 // pred_fallthru
      _
    // Predicated region
    $region38: #{tpu_custom_call.1} parent=1 // pred_check
      _
    $region39: #{tpu_custom_call.1} parent=1 // pred_check_branch
      %69 = sbr.rel (0) target = $region41
    $region40: #{tpu_custom_call.1} parent=1 // pred_region
      %71 = dma.done [#allocation7], 32
    $region41: #{tpu_custom_call.1} parent=1 // pred_fallthru
      _
    %v72 = vld [vmem:[%s3] sm:$0xff]
    %v73 = vld [vmem:[#allocation6] sm:$0xff]
    %v74 = vld [vmem:[#allocation6 + $0x8] sm:$0xff]
    %v75 = vld [vmem:[#allocation6 + $0x10] sm:$0xff]
    %v76 = vld [vmem:[#allocation6 + $0x18] sm:$0xff]
    %v77 = vld [vmem:[#allocation6 + $0x20] sm:$0xff]
    %v78 = vld [vmem:[#allocation6 + $0x28] sm:$0xff]
    %v79 = vld [vmem:[#allocation6 + $0x30] sm:$0xff]
    %v80 = vld [vmem:[#allocation6 + $0x38] sm:$0xff]
    %v81 = vld [vmem:[#allocation6 + $0x40] sm:$0xff]
    %v82 = vld [vmem:[#allocation6 + $0x48] sm:$0xff]
    %v83 = vld [vmem:[#allocation6 + $0x50] sm:$0xff]
    %v84 = vld [vmem:[#allocation6 + $0x58] sm:$0xff]
    %v85 = vld [vmem:[#allocation6 + $0x60] sm:$0xff]
    %v86 = vld [vmem:[#allocation6 + $0x68] sm:$0xff]
    %v87 = vld [vmem:[#allocation6 + $0x70] sm:$0xff]
    %v88 = vld [vmem:[#allocation6 + $0x78] sm:$0xff]
    %v89 = vld [vmem:[%s4] sm:$0xff]
    %91 = vset.pattern.permute.xlu0 0
    %92 = vperm.xlu0 %91, %v89
    %v93 = vpop.permute.xlu0 %92
    %vm95 = vcmask 261120
    %v97 = vsel %vm95, %v72, 0
    %99 = vmatpush.msra.mxu0 0.0
    %100 = vmatpush.msra.mxu0 0.0
    %101 = vmatpush.msra.mxu0 0.0
    %102 = vmatpush.msra.mxu0 0.0
    %103 = vmatpush.msra.mxu0 0.0
    %104 = vmatpush.msra.mxu0 0.0
    %105 = vmatpush.msra.mxu0 0.0
    %106 = vmatpush.msra.mxu0 0.0
    %107 = vmatpush.msra.mxu0 0.0
    %108 = vmatpush.msra.mxu0 0.0
    %109 = vmatpush.msra.mxu0 0.0
    %110 = vmatpush.msra.mxu0 0.0
    %111 = vmatpush.msra.mxu0 %v85
    %112 = vmatpush.msra.mxu0 %v81
    %113 = vmatpush.msra.mxu0 %v77
    %114 = vmatpush.msra.mxu0 %v73
    %115 = vmatmul.f32.gmra.mxu0 %v97
    %v116 = vpop.f32.mrf.mxu0
    %v117 = vadd.f32 %v93, %v116
    %118 = vdwg.mxu0
    %119 = vmatpush.msra.mxu0 0.0
    %120 = vmatpush.msra.mxu0 0.0
    %121 = vmatpush.msra.mxu0 0.0
    %122 = vmatpush.msra.mxu0 0.0
    %123 = vmatpush.msra.mxu0 0.0
    %124 = vmatpush.msra.mxu0 0.0
    %125 = vmatpush.msra.mxu0 0.0
    %126 = vmatpush.msra.mxu0 0.0
    %127 = vmatpush.msra.mxu0 0.0
    %128 = vmatpush.msra.mxu0 0.0
    %129 = vmatpush.msra.mxu0 0.0
    %130 = vmatpush.msra.mxu0 0.0
    %131 = vmatpush.msra.mxu0 %v86
    %132 = vmatpush.msra.mxu0 %v82
    %133 = vmatpush.msra.mxu0 %v78
    %134 = vmatpush.msra.mxu0 %v74
    %135 = vmatmul.f32.gmra.mxu0 %v97
    %v136 = vpop.f32.mrf.mxu0
    %v137 = vadd.f32 %v93, %v136
    %138 = vdwg.mxu0
    %139 = vmatpush.msra.mxu0 0.0
    %140 = vmatpush.msra.mxu0 0.0
    %141 = vmatpush.msra.mxu0 0.0
    %142 = vmatpush.msra.mxu0 0.0
    %143 = vmatpush.msra.mxu0 0.0
    %144 = vmatpush.msra.mxu0 0.0
    %145 = vmatpush.msra.mxu0 0.0
    %146 = vmatpush.msra.mxu0 0.0
    %147 = vmatpush.msra.mxu0 0.0
    %148 = vmatpush.msra.mxu0 0.0
    %149 = vmatpush.msra.mxu0 0.0
    %150 = vmatpush.msra.mxu0 0.0
    %151 = vmatpush.msra.mxu0 %v87
    %152 = vmatpush.msra.mxu0 %v83
    %153 = vmatpush.msra.mxu0 %v79
    %154 = vmatpush.msra.mxu0 %v75
    %155 = vmatmul.f32.gmra.mxu0 %v97
    %v156 = vpop.f32.mrf.mxu0
    %v157 = vadd.f32 %v93, %v156
    %158 = vdwg.mxu0
    %159 = vmatpush.msra.mxu0 0.0
    %160 = vmatpush.msra.mxu0 0.0
    %161 = vmatpush.msra.mxu0 0.0
    %162 = vmatpush.msra.mxu0 0.0
    %163 = vmatpush.msra.mxu0 0.0
    %164 = vmatpush.msra.mxu0 0.0
    %165 = vmatpush.msra.mxu0 0.0
    %166 = vmatpush.msra.mxu0 0.0
    %167 = vmatpush.msra.mxu0 0.0
    %168 = vmatpush.msra.mxu0 0.0
    %169 = vmatpush.msra.mxu0 0.0
    %170 = vmatpush.msra.mxu0 0.0
    %171 = vmatpush.msra.mxu0 %v88
    %172 = vmatpush.msra.mxu0 %v84
    %173 = vmatpush.msra.mxu0 %v80
    %174 = vmatpush.msra.mxu0 %v76
    %175 = vmatmul.f32.gmra.mxu0 %v97
    %v176 = vpop.f32.mrf.mxu0
    %v177 = vadd.f32 %v93, %v176
    %178 = vdwg.mxu0
    %v179 = vmax.f32 %v117, 0.0
    %v180 = vmax.f32 %v137, 0.0
    %v181 = vmax.f32 %v157, 0.0
    %v182 = vmax.f32 %v177, 0.0
    %v183 = vld [vmem:[#allocation3] sm:$0xff]
    %v184 = vld [vmem:[#allocation3 + $0x8] sm:$0xff]
    %185 = vmatpush.xpose.msra.mxu0 0.0
    %186 = vmatpush.xpose.msra.mxu0 0.0
    %187 = vmatpush.xpose.msra.mxu0 0.0
    %188 = vmatpush.xpose.msra.mxu0 0.0
    %189 = vmatpush.xpose.msra.mxu0 0.0
    %190 = vmatpush.xpose.msra.mxu0 0.0
    %191 = vmatpush.xpose.msra.mxu0 0.0
    %192 = vmatpush.xpose.msra.mxu0 0.0
    %193 = vmatpush.xpose.msra.mxu0 0.0
    %194 = vmatpush.xpose.msra.mxu0 0.0
    %195 = vmatpush.xpose.msra.mxu0 0.0
    %196 = vmatpush.xpose.msra.mxu0 0.0
    %197 = vmatpush.xpose.msra.mxu0 0.0
    %198 = vmatpush.xpose.msra.mxu0 0.0
    %199 = vmatpush.xpose.msra.mxu0 0.0
    %200 = vmatpush.xpose.msra.mxu0 %v179
    %201 = vmatmul.f32.gmra.mxu0 %v183
    %v202 = vpop.f32.mrf.mxu0
    %v203 = vadd.f32 0.0, %v202
    %204 = vdwg.mxu0
    %205 = vmatpush.xpose.msra.mxu0 0.0
    %206 = vmatpush.xpose.msra.mxu0 0.0
    %207 = vmatpush.xpose.msra.mxu0 0.0
    %208 = vmatpush.xpose.msra.mxu0 0.0
    %209 = vmatpush.xpose.msra.mxu0 0.0
    %210 = vmatpush.xpose.msra.mxu0 0.0
    %211 = vmatpush.xpose.msra.mxu0 0.0
    %212 = vmatpush.xpose.msra.mxu0 0.0
    %213 = vmatpush.xpose.msra.mxu0 0.0
    %214 = vmatpush.xpose.msra.mxu0 0.0
    %215 = vmatpush.xpose.msra.mxu0 0.0
    %216 = vmatpush.xpose.msra.mxu0 0.0
    %217 = vmatpush.xpose.msra.mxu0 0.0
    %218 = vmatpush.xpose.msra.mxu0 0.0
    %219 = vmatpush.xpose.msra.mxu0 0.0
    %220 = vmatpush.xpose.msra.mxu0 %v180
    %221 = vmatmul.f32.gmra.mxu0 %v184
    %v222 = vpop.f32.mrf.mxu0
    %v223 = vadd.f32 %v203, %v222
    %224 = vdwg.mxu0
    %vm225 = vcmask 64512
    %v226 = vsel %vm225, %v223, -inf
    %227 = vmax.xlane.f32.xlu0 %v226
    %v228 = vpop.xlane.xlu0 %227
    %v229 = vsub.f32 %v228, %v223
    %v230 = vld [vmem:[#allocation8] sm:$0x1]
    %v232 = vperm.slane %v230, 0
    %v234 = vmul.f32 %v232, %v229
    %v235 = vsel %vm225, %v234, -inf
    %236 = vmax.xlane.f32.xlu0 %v235
    %v237 = vpop.xlane.xlu0 %236
    %v238 = vsub.f32 %v234, %v237
    %v239 = vmul.f32 %v238, 1.442695
    %v240 = vpow.pop %v239
    %v241 = vsel %vm225, %v240, 0.0
    %242 = vadd.xlane.f32.xlu0 %v241
    %v243 = vpop.xlane.xlu0 %242
    %v244 = vrcp.pop %v243
    %v245 = vmul.f32 %v243, %v244
    %v246 = vsub.f32 1.0, %v245
    %v247 = vmul.f32 %v244, %v246
    %v248 = vadd.f32 %v244, %v247
    %vm249 = vweird.f32 %v243
    %vm250 = vweird.f32 %v244
    %vm251 = vmor %vm249, %vm250
    %v252 = vsel %vm251, %v244, %v248
    %v253 = vand.u32 2147483647, %v243
    %vm254 = vcmp.eq.f32.partialorder %v253, 8.507059e+37
    %v255 = vand.u32 %v243, 2147483648
    %v256 = vor.u32 1.1754944e-38, %v255
    %v257 = vsel %vm254, %v256, %v252
    %v258 = vmul.f32 %v240, %v257
    %v259 = vsel %vm225, %v229, -inf
    %260 = vmax.xlane.f32.xlu0 %v259
    %v261 = vpop.xlane.xlu0 %260
    %v262 = vsub.f32 %v229, %v261
    %v263 = vmul.f32 %v262, 1.442695
    %v264 = vpow.pop %v263
    %v265 = vsel %vm225, %v264, 0.0
    %266 = vadd.xlane.f32.xlu0 %v265
    %v267 = vpop.xlane.xlu0 %266
    %v268 = vrcp.pop %v267
    %v269 = vmul.f32 %v267, %v268
    %v270 = vsub.f32 1.0, %v269
    %v271 = vmul.f32 %v268, %v270
    %v272 = vadd.f32 %v268, %v271
    %vm273 = vweird.f32 %v267
    %vm274 = vweird.f32 %v268
    %vm275 = vmor %vm273, %vm274
    %v276 = vsel %vm275, %v268, %v272
    %v277 = vand.u32 2147483647, %v267
    %vm278 = vcmp.eq.f32.partialorder %v277, 8.507059e+37
    %v279 = vand.u32 %v267, 2147483648
    %v280 = vor.u32 1.1754944e-38, %v279
    %v281 = vsel %vm278, %v280, %v276
    %v282 = vmul.f32 %v264, %v281
    %v283 = vadd.f32 %v258, %v282
    %284 = vxpose.xlu0.b32.start [1/16] %v283, 128
    %285 = vxpose.xlu0.b32.cont [2/16] 0.0, 128
    %286 = vxpose.xlu0.b32.cont [3/16] 0.0, 128
    %287 = vxpose.xlu0.b32.cont [4/16] 0.0, 128
    %288 = vxpose.xlu0.b32.cont [5/16] 0.0, 128
    %289 = vxpose.xlu0.b32.cont [6/16] 0.0, 128
    %290 = vxpose.xlu0.b32.cont [7/16] 0.0, 128
    %291 = vxpose.xlu0.b32.cont [8/16] 0.0, 128
    %292 = vxpose.xlu0.b32.cont [9/16] 0.0, 128
    %293 = vxpose.xlu0.b32.cont [10/16] 0.0, 128
    %294 = vxpose.xlu0.b32.cont [11/16] 0.0, 128
    %295 = vxpose.xlu0.b32.cont [12/16] 0.0, 128
    %296 = vxpose.xlu0.b32.cont [13/16] 0.0, 128
    %297 = vxpose.xlu0.b32.cont [14/16] 0.0, 128
    %298 = vxpose.xlu0.b32.cont [15/16] 0.0, 128
    %299 = vxpose.xlu0.b32.end [16/16] 0.0, 128
    %v300 = vpop.trf.xlu0
    %v301 = vpop.trf.xlu0
    %v302 = vpop.trf.xlu0
    %v303 = vpop.trf.xlu0
    %v304 = vpop.trf.xlu0
    %v305 = vpop.trf.xlu0
    %v306 = vpop.trf.xlu0
    %v307 = vpop.trf.xlu0
    %v308 = vpop.trf.xlu0
    %v309 = vpop.trf.xlu0
    %v310 = vpop.trf.xlu0
    %v311 = vpop.trf.xlu0
    %v312 = vpop.trf.xlu0
    %v313 = vpop.trf.xlu0
    %v314 = vpop.trf.xlu0
    %v315 = vpop.trf.xlu0
    %v317 = vsel %vm225, %v300, 0
    %319 = vmatpush.msra.mxu0 0.0
    %320 = vmatpush.msra.mxu0 0.0
    %321 = vmatpush.msra.mxu0 0.0
    %322 = vmatpush.msra.mxu0 0.0
    %323 = vmatpush.msra.mxu0 0.0
    %324 = vmatpush.msra.mxu0 0.0
    %325 = vmatpush.msra.mxu0 0.0
    %326 = vmatpush.msra.mxu0 0.0
    %327 = vmatpush.msra.mxu0 0.0
    %328 = vmatpush.msra.mxu0 0.0
    %329 = vmatpush.msra.mxu0 0.0
    %330 = vmatpush.msra.mxu0 0.0
    %331 = vmatpush.msra.mxu0 0.0
    %332 = vmatpush.msra.mxu0 0.0
    %333 = vmatpush.msra.mxu0 0.0
    %334 = vmatpush.msra.mxu0 %v183
    %335 = vmatmul.f32.gmra.mxu0 %v317
    %v336 = vpop.f32.mrf.mxu0
    %v337 = vadd.f32 %v179, %v336
    %338 = vdwg.mxu0
    %339 = vmatpush.msra.mxu0 0.0
    %340 = vmatpush.msra.mxu0 0.0
    %341 = vmatpush.msra.mxu0 0.0
    %342 = vmatpush.msra.mxu0 0.0
    %343 = vmatpush.msra.mxu0 0.0
    %344 = vmatpush.msra.mxu0 0.0
    %345 = vmatpush.msra.mxu0 0.0
    %346 = vmatpush.msra.mxu0 0.0
    %347 = vmatpush.msra.mxu0 0.0
    %348 = vmatpush.msra.mxu0 0.0
    %349 = vmatpush.msra.mxu0 0.0
    %350 = vmatpush.msra.mxu0 0.0
    %351 = vmatpush.msra.mxu0 0.0
    %352 = vmatpush.msra.mxu0 0.0
    %353 = vmatpush.msra.mxu0 0.0
    %354 = vmatpush.msra.mxu0 %v184
    %355 = vmatmul.f32.gmra.mxu0 %v317
    %v356 = vpop.f32.mrf.mxu0
    %v357 = vadd.f32 %v180, %v356
    %358 = vdwg.mxu0
    %359 = vst [vmem:[#allocation2] sm:$0xff] %v337
    %360 = vst [vmem:[#allocation2 + $0x8] sm:$0xff] %v357
    %v361 = vld [vmem:[#allocation3 + $0x10] sm:$0xff]
    %v362 = vld [vmem:[#allocation3 + $0x18] sm:$0xff]
    %363 = vmatpush.xpose.msra.mxu0 0.0
    %364 = vmatpush.xpose.msra.mxu0 0.0
    %365 = vmatpush.xpose.msra.mxu0 0.0
    %366 = vmatpush.xpose.msra.mxu0 0.0
    %367 = vmatpush.xpose.msra.mxu0 0.0
    %368 = vmatpush.xpose.msra.mxu0 0.0
    %369 = vmatpush.xpose.msra.mxu0 0.0
    %370 = vmatpush.xpose.msra.mxu0 0.0
    %371 = vmatpush.xpose.msra.mxu0 0.0
    %372 = vmatpush.xpose.msra.mxu0 0.0
    %373 = vmatpush.xpose.msra.mxu0 0.0
    %374 = vmatpush.xpose.msra.mxu0 0.0
    %375 = vmatpush.xpose.msra.mxu0 0.0
    %376 = vmatpush.xpose.msra.mxu0 0.0
    %377 = vmatpush.xpose.msra.mxu0 0.0
    %378 = vmatpush.xpose.msra.mxu0 %v181
    %379 = vmatmul.f32.gmra.mxu0 %v361
    %v380 = vpop.f32.mrf.mxu0
    %v381 = vadd.f32 0.0, %v380
    %382 = vdwg.mxu0
    %383 = vmatpush.xpose.msra.mxu0 0.0
    %384 = vmatpush.xpose.msra.mxu0 0.0
    %385 = vmatpush.xpose.msra.mxu0 0.0
    %386 = vmatpush.xpose.msra.mxu0 0.0
    %387 = vmatpush.xpose.msra.mxu0 0.0
    %388 = vmatpush.xpose.msra.mxu0 0.0
    %389 = vmatpush.xpose.msra.mxu0 0.0
    %390 = vmatpush.xpose.msra.mxu0 0.0
    %391 = vmatpush.xpose.msra.mxu0 0.0
    %392 = vmatpush.xpose.msra.mxu0 0.0
    %393 = vmatpush.xpose.msra.mxu0 0.0
    %394 = vmatpush.xpose.msra.mxu0 0.0
    %395 = vmatpush.xpose.msra.mxu0 0.0
    %396 = vmatpush.xpose.msra.mxu0 0.0
    %397 = vmatpush.xpose.msra.mxu0 0.0
    %398 = vmatpush.xpose.msra.mxu0 %v182
    %399 = vmatmul.f32.gmra.mxu0 %v362
    %v400 = vpop.f32.mrf.mxu0
    %v401 = vadd.f32 %v381, %v400
    %402 = vdwg.mxu0
    %v403 = vsel %vm225, %v401, -inf
    %404 = vmax.xlane.f32.xlu0 %v403
    %v405 = vpop.xlane.xlu0 %404
    %v406 = vsub.f32 %v405, %v401
    %s407 = scalar_lea.vmem [#allocation8], 1
    %v408 = vld [vmem:[%s407] sm:$0x1]
    %v410 = vperm.slane %v408, 0
    %v412 = vmul.f32 %v410, %v406
    %v413 = vsel %vm225, %v412, -inf
    %414 = vmax.xlane.f32.xlu0 %v413
    %v415 = vpop.xlane.xlu0 %414
    %v416 = vsub.f32 %v412, %v415
    %v417 = vmul.f32 %v416, 1.442695
    %v418 = vpow.pop %v417
    %v419 = vsel %vm225, %v418, 0.0
    %420 = vadd.xlane.f32.xlu0 %v419
    %v421 = vpop.xlane.xlu0 %420
    %v422 = vrcp.pop %v421
    %v423 = vmul.f32 %v421, %v422
    %v424 = vsub.f32 1.0, %v423
    %v425 = vmul.f32 %v422, %v424
    %v426 = vadd.f32 %v422, %v425
    %vm427 = vweird.f32 %v421
    %vm428 = vweird.f32 %v422
    %vm429 = vmor %vm427, %vm428
    %v430 = vsel %vm429, %v422, %v426
    %v431 = vand.u32 2147483647, %v421
    %vm432 = vcmp.eq.f32.partialorder %v431, 8.507059e+37
    %v433 = vand.u32 %v421, 2147483648
    %v434 = vor.u32 1.1754944e-38, %v433
    %v435 = vsel %vm432, %v434, %v430
    %v436 = vmul.f32 %v418, %v435
    %v437 = vsel %vm225, %v406, -inf
    %438 = vmax.xlane.f32.xlu0 %v437
    %v439 = vpop.xlane.xlu0 %438
    %v440 = vsub.f32 %v406, %v439
    %v441 = vmul.f32 %v440, 1.442695
    %v442 = vpow.pop %v441
    %v443 = vsel %vm225, %v442, 0.0
    %444 = vadd.xlane.f32.xlu0 %v443
    %v445 = vpop.xlane.xlu0 %444
    %v446 = vrcp.pop %v445
    %v447 = vmul.f32 %v445, %v446
    %v448 = vsub.f32 1.0, %v447
    %v449 = vmul.f32 %v446, %v448
    %v450 = vadd.f32 %v446, %v449
    %vm451 = vweird.f32 %v445
    %vm452 = vweird.f32 %v446
    %vm453 = vmor %vm451, %vm452
    %v454 = vsel %vm453, %v446, %v450
    %v455 = vand.u32 2147483647, %v445
    %vm456 = vcmp.eq.f32.partialorder %v455, 8.507059e+37
    %v457 = vand.u32 %v445, 2147483648
    %v458 = vor.u32 1.1754944e-38, %v457
    %v459 = vsel %vm456, %v458, %v454
    %v460 = vmul.f32 %v442, %v459
    %v461 = vadd.f32 %v436, %v460
    %462 = vxpose.xlu0.b32.start [1/16] %v461, 128
    %463 = vxpose.xlu0.b32.cont [2/16] 0.0, 128
    %464 = vxpose.xlu0.b32.cont [3/16] 0.0, 128
    %465 = vxpose.xlu0.b32.cont [4/16] 0.0, 128
    %466 = vxpose.xlu0.b32.cont [5/16] 0.0, 128
    %467 = vxpose.xlu0.b32.cont [6/16] 0.0, 128
    %468 = vxpose.xlu0.b32.cont [7/16] 0.0, 128
    %469 = vxpose.xlu0.b32.cont [8/16] 0.0, 128
    %470 = vxpose.xlu0.b32.cont [9/16] 0.0, 128
    %471 = vxpose.xlu0.b32.cont [10/16] 0.0, 128
    %472 = vxpose.xlu0.b32.cont [11/16] 0.0, 128
    %473 = vxpose.xlu0.b32.cont [12/16] 0.0, 128
    %474 = vxpose.xlu0.b32.cont [13/16] 0.0, 128
    %475 = vxpose.xlu0.b32.cont [14/16] 0.0, 128
    %476 = vxpose.xlu0.b32.cont [15/16] 0.0, 128
    %477 = vxpose.xlu0.b32.end [16/16] 0.0, 128
    %v478 = vpop.trf.xlu0
    %v479 = vpop.trf.xlu0
    %v480 = vpop.trf.xlu0
    %v481 = vpop.trf.xlu0
    %v482 = vpop.trf.xlu0
    %v483 = vpop.trf.xlu0
    %v484 = vpop.trf.xlu0
    %v485 = vpop.trf.xlu0
    %v486 = vpop.trf.xlu0
    %v487 = vpop.trf.xlu0
    %v488 = vpop.trf.xlu0
    %v489 = vpop.trf.xlu0
    %v490 = vpop.trf.xlu0
    %v491 = vpop.trf.xlu0
    %v492 = vpop.trf.xlu0
    %v493 = vpop.trf.xlu0
    %v495 = vsel %vm225, %v478, 0
    %497 = vmatpush.msra.mxu0 0.0
    %498 = vmatpush.msra.mxu0 0.0
    %499 = vmatpush.msra.mxu0 0.0
    %500 = vmatpush.msra.mxu0 0.0
    %501 = vmatpush.msra.mxu0 0.0
    %502 = vmatpush.msra.mxu0 0.0
    %503 = vmatpush.msra.mxu0 0.0
    %504 = vmatpush.msra.mxu0 0.0
    %505 = vmatpush.msra.mxu0 0.0
    %506 = vmatpush.msra.mxu0 0.0
    %507 = vmatpush.msra.mxu0 0.0
    %508 = vmatpush.msra.mxu0 0.0
    %509 = vmatpush.msra.mxu0 0.0
    %510 = vmatpush.msra.mxu0 0.0
    %511 = vmatpush.msra.mxu0 0.0
    %512 = vmatpush.msra.mxu0 %v361
    %513 = vmatmul.f32.gmra.mxu0 %v495
    %v514 = vpop.f32.mrf.mxu0
    %v515 = vadd.f32 %v181, %v514
    %516 = vdwg.mxu0
    %517 = vmatpush.msra.mxu0 0.0
    %518 = vmatpush.msra.mxu0 0.0
    %519 = vmatpush.msra.mxu0 0.0
    %520 = vmatpush.msra.mxu0 0.0
    %521 = vmatpush.msra.mxu0 0.0
    %522 = vmatpush.msra.mxu0 0.0
    %523 = vmatpush.msra.mxu0 0.0
    %524 = vmatpush.msra.mxu0 0.0
    %525 = vmatpush.msra.mxu0 0.0
    %526 = vmatpush.msra.mxu0 0.0
    %527 = vmatpush.msra.mxu0 0.0
    %528 = vmatpush.msra.mxu0 0.0
    %529 = vmatpush.msra.mxu0 0.0
    %530 = vmatpush.msra.mxu0 0.0
    %531 = vmatpush.msra.mxu0 0.0
    %532 = vmatpush.msra.mxu0 %v362
    %533 = vmatmul.f32.gmra.mxu0 %v495
    %v534 = vpop.f32.mrf.mxu0
    %v535 = vadd.f32 %v182, %v534
    %536 = vdwg.mxu0
    %537 = vst [vmem:[#allocation2 + $0x10] sm:$0xff] %v515
    %538 = vst [vmem:[#allocation2 + $0x18] sm:$0xff] %v535
    %v539 = vld [vmem:[%s5] sm:$0xff]
    %v540 = vld [vmem:[#allocation2] sm:$0xff]
    %v541 = vld [vmem:[#allocation2 + $0x8] sm:$0xff]
    %v542 = vld [vmem:[#allocation2 + $0x10] sm:$0xff]
    %v543 = vld [vmem:[#allocation2 + $0x18] sm:$0xff]
    %v544 = vld [vmem:[%s6] sm:$0xff]
    %546 = vset.pattern.permute.xlu0 0
    %547 = vperm.xlu0 %546, %v544
    %v548 = vpop.permute.xlu0 %547
    %v551 = vsel %vm225, %v539, 0
    %553 = vmatpush.msra.mxu0 0.0
    %554 = vmatpush.msra.mxu0 0.0
    %555 = vmatpush.msra.mxu0 0.0
    %556 = vmatpush.msra.mxu0 0.0
    %557 = vmatpush.msra.mxu0 0.0
    %558 = vmatpush.msra.mxu0 0.0
    %559 = vmatpush.msra.mxu0 0.0
    %560 = vmatpush.msra.mxu0 0.0
    %561 = vmatpush.msra.mxu0 0.0
    %562 = vmatpush.msra.mxu0 0.0
    %563 = vmatpush.msra.mxu0 0.0
    %564 = vmatpush.msra.mxu0 0.0
    %565 = vmatpush.msra.mxu0 0.0
    %566 = vmatpush.msra.mxu0 0.0
    %567 = vmatpush.msra.mxu0 0.0
    %568 = vmatpush.msra.mxu0 %v540
    %569 = vmatmul.f32.gmra.mxu0 %v551
    %v570 = vpop.f32.mrf.mxu0
    %v571 = vadd.f32 %v548, %v570
    %572 = vdwg.mxu0
    %573 = vmatpush.msra.mxu0 0.0
    %574 = vmatpush.msra.mxu0 0.0
    %575 = vmatpush.msra.mxu0 0.0
    %576 = vmatpush.msra.mxu0 0.0
    %577 = vmatpush.msra.mxu0 0.0
    %578 = vmatpush.msra.mxu0 0.0
    %579 = vmatpush.msra.mxu0 0.0
    %580 = vmatpush.msra.mxu0 0.0
    %581 = vmatpush.msra.mxu0 0.0
    %582 = vmatpush.msra.mxu0 0.0
    %583 = vmatpush.msra.mxu0 0.0
    %584 = vmatpush.msra.mxu0 0.0
    %585 = vmatpush.msra.mxu0 0.0
    %586 = vmatpush.msra.mxu0 0.0
    %587 = vmatpush.msra.mxu0 0.0
    %588 = vmatpush.msra.mxu0 %v541
    %589 = vmatmul.f32.gmra.mxu0 %v551
    %v590 = vpop.f32.mrf.mxu0
    %v591 = vadd.f32 %v548, %v590
    %592 = vdwg.mxu0
    %593 = vmatpush.msra.mxu0 0.0
    %594 = vmatpush.msra.mxu0 0.0
    %595 = vmatpush.msra.mxu0 0.0
    %596 = vmatpush.msra.mxu0 0.0
    %597 = vmatpush.msra.mxu0 0.0
    %598 = vmatpush.msra.mxu0 0.0
    %599 = vmatpush.msra.mxu0 0.0
    %600 = vmatpush.msra.mxu0 0.0
    %601 = vmatpush.msra.mxu0 0.0
    %602 = vmatpush.msra.mxu0 0.0
    %603 = vmatpush.msra.mxu0 0.0
    %604 = vmatpush.msra.mxu0 0.0
    %605 = vmatpush.msra.mxu0 0.0
    %606 = vmatpush.msra.mxu0 0.0
    %607 = vmatpush.msra.mxu0 0.0
    %608 = vmatpush.msra.mxu0 %v542
    %609 = vmatmul.f32.gmra.mxu0 %v551
    %v610 = vpop.f32.mrf.mxu0
    %v611 = vadd.f32 %v548, %v610
    %612 = vdwg.mxu0
    %613 = vmatpush.msra.mxu0 0.0
    %614 = vmatpush.msra.mxu0 0.0
    %615 = vmatpush.msra.mxu0 0.0
    %616 = vmatpush.msra.mxu0 0.0
    %617 = vmatpush.msra.mxu0 0.0
    %618 = vmatpush.msra.mxu0 0.0
    %619 = vmatpush.msra.mxu0 0.0
    %620 = vmatpush.msra.mxu0 0.0
    %621 = vmatpush.msra.mxu0 0.0
    %622 = vmatpush.msra.mxu0 0.0
    %623 = vmatpush.msra.mxu0 0.0
    %624 = vmatpush.msra.mxu0 0.0
    %625 = vmatpush.msra.mxu0 0.0
    %626 = vmatpush.msra.mxu0 0.0
    %627 = vmatpush.msra.mxu0 0.0
    %628 = vmatpush.msra.mxu0 %v543
    %629 = vmatmul.f32.gmra.mxu0 %v551
    %v630 = vpop.f32.mrf.mxu0
    %v631 = vadd.f32 %v548, %v630
    %632 = vdwg.mxu0
    %633 = vst [vmem:[#allocation9] sm:$0xff] %v571
    %634 = vst [vmem:[#allocation9 + $0x8] sm:$0xff] %v591
    %635 = vst [vmem:[#allocation9 + $0x10] sm:$0xff] %v611
    %636 = vst [vmem:[#allocation9 + $0x18] sm:$0xff] %v631
    // Predicated region
    $region42: #{tpu_custom_call.1} parent=1 // pred_check
      _
    $region43: #{tpu_custom_call.1} parent=1 // pred_check_branch
      %638 = sbr.rel (0) target = $region45
    $region44: #{tpu_custom_call.1} parent=1 // pred_region
      %640 = vsyncadd [#allocation5], 0
      %s642 = sshll.u32 [#allocation9], 4
      %s643 = int_to_ptr.vmem [resolvable:$true] %s642
      %s644 = sshll.u32 %s7, 4
      %s645 = int_to_ptr.hbm [resolvable:$true] %s644
      %647 = dma.vmem_to_hbm [thread:$0]  %s643, 512, %s645, [#allocation5]
    $region45: #{tpu_custom_call.1} parent=1 // pred_fallthru
      _
    // Predicated region
    $region46: #{tpu_custom_call.1} parent=1 // pred_check
      _
    $region47: #{tpu_custom_call.1} parent=1 // pred_check_branch
      %649 = sbr.rel (0) target = $region49
    $region48: #{tpu_custom_call.1} parent=1 // pred_region
      %651 = dma.done [#allocation5], 512
    $region49: #{tpu_custom_call.1} parent=1 // pred_fallthru
      _
    %652 = vsyncpa [#allocation4], 1
    %653 = vsyncpa [#allocation7], 1
    %654 = vsyncpa [#allocation5], 1

</llo_original>
